<compile_context>
chip_gen: v7x
topology: tpu7x:2x2x1
jax: 0.10.0
libtpu: 0.0.40
codegen_flags: <defaults>
</compile_context>

<pallas_src>
import functools

import jax
import jax.numpy as jnp
from jax.experimental import pallas as pl
from jax.experimental.pallas import tpu as pltpu


NEG_SLOPE = 0.01  # torch.nn.LeakyReLU default
IN_DIM, H_DIM, Z_DIM = 11, 6, 2
OUT_ROWS = Z_DIM + IN_DIM  # packed output: [z ; xhat] = 13 rows


def _leaky_relu(x):
    return jnp.where(x >= 0, x, NEG_SLOPE * x)


def _encdec_kernel(x_ref,
                   w1_ref, b1_ref, w2_ref, b2_ref,
                   w3_ref, b3_ref, w4_ref, b4_ref,
                   out_ref):
    # x_ref: [11, TB]  (features on sublanes, batch tile on lanes)
    # wN:    [out, in] (native PyTorch layout), bN: [out, 1]
    x = x_ref[...]

    # encoder
    h1 = jnp.tanh(
        jnp.dot(w1_ref[...], x, preferred_element_type=jnp.float32) + b1_ref[...]
    )                                                                # [6,  TB]
    z = _leaky_relu(
        jnp.dot(w2_ref[...], h1, preferred_element_type=jnp.float32) + b2_ref[...]
    )                                                                # [2,  TB]

    # decoder
    h2 = jnp.tanh(
        jnp.dot(w3_ref[...], z, preferred_element_type=jnp.float32) + b3_ref[...]
    )                                                                # [6,  TB]
    xhat = _leaky_relu(
        jnp.dot(w4_ref[...], h2, preferred_element_type=jnp.float32) + b4_ref[...]
    )                                                                # [11, TB]

    # single packed output block: rows 0:2 = z, rows 2:13 = xhat
    out_ref[0:Z_DIM, :] = z.astype(out_ref.dtype)
    out_ref[Z_DIM:OUT_ROWS, :] = xhat.astype(out_ref.dtype)


@functools.partial(jax.jit, static_argnames=("tb",))
def encoder_decoder_forward(x, params, *, tb=128):
    """x: [B, 11] float32. params: PyTorch-layout weights wN [out,in], biases bN [out,1].

    Returns (z [B, 2], xhat [B, 11])."""
    B = x.shape[0]
    n_tiles = pl.cdiv(B, tb)
    B_pad = n_tiles * tb

    # Transpose to lane-dense [features, batch] and zero-pad batch to a tile
    # multiple (padded columns compute finite garbage and are sliced off).
    x_t = jnp.zeros((IN_DIM, B_pad), x.dtype).at[:, :B].set(x.T)

    w1, b1 = params["w1"], params["b1"]
    w2, b2 = params["w2"], params["b2"]
    w3, b3 = params["w3"], params["b3"]
    w4, b4 = params["w4"], params["b4"]

    const = lambda i: (0, 0)  # weights/biases: same (full) block every grid step
    weight_specs = [
        pl.BlockSpec(w1.shape, const), pl.BlockSpec(b1.shape, const),
        pl.BlockSpec(w2.shape, const), pl.BlockSpec(b2.shape, const),
        pl.BlockSpec(w3.shape, const), pl.BlockSpec(b3.shape, const),
        pl.BlockSpec(w4.shape, const), pl.BlockSpec(b4.shape, const),
    ]

    flops_per_row = 2 * (IN_DIM * H_DIM + H_DIM * Z_DIM + Z_DIM * H_DIM + H_DIM * IN_DIM)

    out = pl.pallas_call(
        _encdec_kernel,
        out_shape=jax.ShapeDtypeStruct((OUT_ROWS, B_pad), jnp.float32),
        grid_spec=pltpu.PrefetchScalarGridSpec(
            num_scalar_prefetch=0,
            grid=(n_tiles,),
            in_specs=[pl.BlockSpec((IN_DIM, tb), lambda i: (0, i))] + weight_specs,
            out_specs=pl.BlockSpec((OUT_ROWS, tb), lambda i: (0, i)),
        ),
        compiler_params=pltpu.CompilerParams(
            dimension_semantics=("parallel",),
            vmem_limit_bytes=64 << 20,
        ),
        cost_estimate=pl.CostEstimate(
            flops=flops_per_row * B_pad,
            transcendentals=2 * H_DIM * B_pad,                  # 12 tanh per row
            bytes_accessed=4 * B_pad * (IN_DIM + OUT_ROWS),
        ),
    )(x_t, w1, b1, w2, b2, w3, b3, w4, b4)

    z = out[:Z_DIM, :B].T          # [B, 2]
    xhat = out[Z_DIM:, :B].T       # [B, 11]
    return z, xhat


def init_params(key):
    """Deterministic init mimicking nn.Linear:
       encoder: Linear(11,6), Linear(6,2); decoder: Linear(2,6), Linear(6,11).
       Weights in native PyTorch [out, in] layout; biases stored as [out, 1]."""
    dims = [(IN_DIM, H_DIM), (H_DIM, Z_DIM), (Z_DIM, H_DIM), (H_DIM, IN_DIM)]
    params = {}
    for idx, (fan_in, fan_out) in enumerate(dims, start=1):
        key, kw, kb = jax.random.split(key, 3)
        bound = 1.0 / jnp.sqrt(fan_in)
        params[f"w{idx}"] = jax.random.uniform(
            kw, (fan_out, fan_in), jnp.float32, -bound, bound)
        params[f"b{idx}"] = jax.random.uniform(
            kb, (fan_out, 1), jnp.float32, -bound, bound)
    return params


def reference_forward(x, params):
    """Pure-JAX reference of the same math (correctness check)."""
    def linear(h, w, b):
        return h @ w.T + b.reshape(1, -1)
    h1 = jnp.tanh(linear(x, params["w1"], params["b1"]))
    z = _leaky_relu(linear(h1, params["w2"], params["b2"]))
    h2 = jnp.tanh(linear(z, params["w3"], params["b3"]))
    xhat = _leaky_relu(linear(h2, params["w4"], params["b4"]))
    return z, xhat


if __name__ == "__main__":
    key = jax.random.PRNGKey(0)
    key, kx = jax.random.split(key)

    B = 8  # small demo batch (exercises the remainder/padding path); 11 wine features
    x = jax.random.normal(kx, (B, IN_DIM), jnp.float32)
    params = init_params(key)

    z, xhat = encoder_decoder_forward(x, params)
    jax.block_until_ready((z, xhat))

    # sanity check vs pure-JAX reference
    z_ref, xhat_ref = reference_forward(x, params)
    assert z.shape == (B, Z_DIM) and xhat.shape == (B, IN_DIM)
    assert jnp.allclose(z, z_ref, atol=1e-4, rtol=1e-4)
    assert jnp.allclose(xhat, xhat_ref, atol=1e-4, rtol=1e-4)

    print("KERNEL_OK")
</pallas_src>

<mosaic_0001>
module attributes {stable_mosaic.version = 11 : i64} {
  func.func @_encdec_kernel(%arg0: i32, %arg1: memref<11x128xf32, #tpu.memory_space<vmem>>, %arg2: memref<6x11xf32, #tpu.memory_space<vmem>>, %arg3: memref<6x1xf32, #tpu.memory_space<vmem>>, %arg4: memref<2x6xf32, #tpu.memory_space<vmem>>, %arg5: memref<2x1xf32, #tpu.memory_space<vmem>>, %arg6: memref<6x2xf32, #tpu.memory_space<vmem>>, %arg7: memref<6x1xf32, #tpu.memory_space<vmem>>, %arg8: memref<11x6xf32, #tpu.memory_space<vmem>>, %arg9: memref<11x1xf32, #tpu.memory_space<vmem>>, %arg10: memref<13x128xf32, #tpu.memory_space<vmem>>) attributes {dimension_semantics = [#tpu.dimension_semantics<parallel>], iteration_bounds = array<i64: 1>, scalar_prefetch = 0 : i64, scratch_operands = 0 : i64, tpu.core_type = #tpu.core_type<tc>, window_params = [{transform_indices = @transform_0, window_bounds = array<i64: 11, 128>}, {pipeline_mode = #tpu.pipeline_mode<synchronous>, transform_indices = @transform_1, window_bounds = array<i64: 6, 11>}, {pipeline_mode = #tpu.pipeline_mode<synchronous>, transform_indices = @transform_2, window_bounds = array<i64: 6, 1>}, {pipeline_mode = #tpu.pipeline_mode<synchronous>, transform_indices = @transform_3, window_bounds = array<i64: 2, 6>}, {pipeline_mode = #tpu.pipeline_mode<synchronous>, transform_indices = @transform_4, window_bounds = array<i64: 2, 1>}, {pipeline_mode = #tpu.pipeline_mode<synchronous>, transform_indices = @transform_5, window_bounds = array<i64: 6, 2>}, {pipeline_mode = #tpu.pipeline_mode<synchronous>, transform_indices = @transform_6, window_bounds = array<i64: 6, 1>}, {pipeline_mode = #tpu.pipeline_mode<synchronous>, transform_indices = @transform_7, window_bounds = array<i64: 11, 6>}, {pipeline_mode = #tpu.pipeline_mode<synchronous>, transform_indices = @transform_8, window_bounds = array<i64: 11, 1>}, {transform_indices = @transform_9, window_bounds = array<i64: 13, 128>}]} {
    %c0 = arith.constant 0 : index
    %c0_0 = arith.constant 0 : index
    %0 = vector.load %arg1[%c0, %c0_0] : memref<11x128xf32, #tpu.memory_space<vmem>>, vector<11x128xf32>
    %c0_1 = arith.constant 0 : index
    %c0_2 = arith.constant 0 : index
    %1 = vector.load %arg2[%c0_1, %c0_2] : memref<6x11xf32, #tpu.memory_space<vmem>>, vector<6x11xf32>
    %cst = arith.constant dense<0.000000e+00> : vector<6x128xf32>
    %2 = tpu.matmul %1, %0, %cst {dimension_numbers = #tpu.dot_dimension_numbers<[1], [0], [0], [1], [0, 0, 1, 1], [], []>} : vector<6x11xf32>, vector<11x128xf32>, vector<6x128xf32> -> vector<6x128xf32>
    %c0_3 = arith.constant 0 : index
    %c0_4 = arith.constant 0 : index
    %3 = vector.load %arg3[%c0_3, %c0_4] : memref<6x1xf32, #tpu.memory_space<vmem>>, vector<6x1xf32>
    %4 = vector.broadcast %3 : vector<6x1xf32> to vector<6x128xf32>
    %5 = arith.addf %2, %4 : vector<6x128xf32>
    %6 = math.tanh %5 : vector<6x128xf32>
    %c0_5 = arith.constant 0 : index
    %c0_6 = arith.constant 0 : index
    %7 = vector.load %arg4[%c0_5, %c0_6] : memref<2x6xf32, #tpu.memory_space<vmem>>, vector<2x6xf32>
    %cst_7 = arith.constant dense<0.000000e+00> : vector<2x128xf32>
    %8 = tpu.matmul %7, %6, %cst_7 {dimension_numbers = #tpu.dot_dimension_numbers<[1], [0], [0], [1], [0, 0, 1, 1], [], []>} : vector<2x6xf32>, vector<6x128xf32>, vector<2x128xf32> -> vector<2x128xf32>
    %c0_8 = arith.constant 0 : index
    %c0_9 = arith.constant 0 : index
    %9 = vector.load %arg5[%c0_8, %c0_9] : memref<2x1xf32, #tpu.memory_space<vmem>>, vector<2x1xf32>
    %10 = vector.broadcast %9 : vector<2x1xf32> to vector<2x128xf32>
    %11 = arith.addf %8, %10 : vector<2x128xf32>
    %cst_10 = arith.constant 0.000000e+00 : f32
    %12 = vector.broadcast %cst_10 : f32 to vector<2x128xf32>
    %13 = arith.cmpf oge, %11, %12 : vector<2x128xf32>
    %cst_11 = arith.constant 0.00999999977 : f32
    %14 = vector.broadcast %cst_11 : f32 to vector<2x128xf32>
    %15 = arith.mulf %14, %11 : vector<2x128xf32>
    %16 = arith.select %13, %11, %15 : vector<2x128xi1>, vector<2x128xf32>
    %c0_12 = arith.constant 0 : index
    %c0_13 = arith.constant 0 : index
    %17 = vector.load %arg6[%c0_12, %c0_13] : memref<6x2xf32, #tpu.memory_space<vmem>>, vector<6x2xf32>
    %cst_14 = arith.constant dense<0.000000e+00> : vector<6x128xf32>
    %18 = tpu.matmul %17, %16, %cst_14 {dimension_numbers = #tpu.dot_dimension_numbers<[1], [0], [0], [1], [0, 0, 1, 1], [], []>} : vector<6x2xf32>, vector<2x128xf32>, vector<6x128xf32> -> vector<6x128xf32>
    %c0_15 = arith.constant 0 : index
    %c0_16 = arith.constant 0 : index
    %19 = vector.load %arg7[%c0_15, %c0_16] : memref<6x1xf32, #tpu.memory_space<vmem>>, vector<6x1xf32>
    %20 = vector.broadcast %19 : vector<6x1xf32> to vector<6x128xf32>
    %21 = arith.addf %18, %20 : vector<6x128xf32>
    %22 = math.tanh %21 : vector<6x128xf32>
    %c0_17 = arith.constant 0 : index
    %c0_18 = arith.constant 0 : index
    %23 = vector.load %arg8[%c0_17, %c0_18] : memref<11x6xf32, #tpu.memory_space<vmem>>, vector<11x6xf32>
    %cst_19 = arith.constant dense<0.000000e+00> : vector<11x128xf32>
    %24 = tpu.matmul %23, %22, %cst_19 {dimension_numbers = #tpu.dot_dimension_numbers<[1], [0], [0], [1], [0, 0, 1, 1], [], []>} : vector<11x6xf32>, vector<6x128xf32>, vector<11x128xf32> -> vector<11x128xf32>
    %c0_20 = arith.constant 0 : index
    %c0_21 = arith.constant 0 : index
    %25 = vector.load %arg9[%c0_20, %c0_21] : memref<11x1xf32, #tpu.memory_space<vmem>>, vector<11x1xf32>
    %26 = vector.broadcast %25 : vector<11x1xf32> to vector<11x128xf32>
    %27 = arith.addf %24, %26 : vector<11x128xf32>
    %cst_22 = arith.constant 0.000000e+00 : f32
    %28 = vector.broadcast %cst_22 : f32 to vector<11x128xf32>
    %29 = arith.cmpf oge, %27, %28 : vector<11x128xf32>
    %cst_23 = arith.constant 0.00999999977 : f32
    %30 = vector.broadcast %cst_23 : f32 to vector<11x128xf32>
    %31 = arith.mulf %30, %27 : vector<11x128xf32>
    %32 = arith.select %29, %27, %31 : vector<11x128xi1>, vector<11x128xf32>
    %c0_24 = arith.constant 0 : index
    %c0_25 = arith.constant 0 : index
    %33 = vector.load %arg10[%c0_24, %c0_25] : memref<13x128xf32, #tpu.memory_space<vmem>>, vector<2x128xf32>
    tpu.vector_store %arg10[%c0_24, %c0_25], %16 {strides = array<i32>} : memref<13x128xf32, #tpu.memory_space<vmem>>, vector<2x128xf32>,
    %c2 = arith.constant 2 : index
    %c0_26 = arith.constant 0 : index
    %34 = vector.load %arg10[%c2, %c0_26] : memref<13x128xf32, #tpu.memory_space<vmem>>, vector<11x128xf32>
    tpu.vector_store %arg10[%c2, %c0_26], %32 {strides = array<i32>} : memref<13x128xf32, #tpu.memory_space<vmem>>, vector<11x128xf32>,
    return
  }
  func.func @transform_0(%arg0: i32) -> (i32, i32) {
    %c0_i32 = arith.constant 0 : i32
    %c0_i32_0 = arith.constant 0 : i32
    return %c0_i32, %arg0 : i32, i32
  }
  func.func @transform_1(%arg0: i32) -> (i32, i32) {
    %c0_i32 = arith.constant 0 : i32
    %c0_i32_0 = arith.constant 0 : i32
    %c0_i32_1 = arith.constant 0 : i32
    return %c0_i32, %c0_i32_0 : i32, i32
  }
  func.func @transform_2(%arg0: i32) -> (i32, i32) {
    %c0_i32 = arith.constant 0 : i32
    %c0_i32_0 = arith.constant 0 : i32
    %c0_i32_1 = arith.constant 0 : i32
    return %c0_i32, %c0_i32_0 : i32, i32
  }
  func.func @transform_3(%arg0: i32) -> (i32, i32) {
    %c0_i32 = arith.constant 0 : i32
    %c0_i32_0 = arith.constant 0 : i32
    %c0_i32_1 = arith.constant 0 : i32
    return %c0_i32, %c0_i32_0 : i32, i32
  }
  func.func @transform_4(%arg0: i32) -> (i32, i32) {
    %c0_i32 = arith.constant 0 : i32
    %c0_i32_0 = arith.constant 0 : i32
    %c0_i32_1 = arith.constant 0 : i32
    return %c0_i32, %c0_i32_0 : i32, i32
  }
  func.func @transform_5(%arg0: i32) -> (i32, i32) {
    %c0_i32 = arith.constant 0 : i32
    %c0_i32_0 = arith.constant 0 : i32
    %c0_i32_1 = arith.constant 0 : i32
    return %c0_i32, %c0_i32_0 : i32, i32
  }
  func.func @transform_6(%arg0: i32) -> (i32, i32) {
    %c0_i32 = arith.constant 0 : i32
    %c0_i32_0 = arith.constant 0 : i32
    %c0_i32_1 = arith.constant 0 : i32
    return %c0_i32, %c0_i32_0 : i32, i32
  }
  func.func @transform_7(%arg0: i32) -> (i32, i32) {
    %c0_i32 = arith.constant 0 : i32
    %c0_i32_0 = arith.constant 0 : i32
    %c0_i32_1 = arith.constant 0 : i32
    return %c0_i32, %c0_i32_0 : i32, i32
  }
  func.func @transform_8(%arg0: i32) -> (i32, i32) {
    %c0_i32 = arith.constant 0 : i32
    %c0_i32_0 = arith.constant 0 : i32
    %c0_i32_1 = arith.constant 0 : i32
    return %c0_i32, %c0_i32_0 : i32, i32
  }
  func.func @transform_9(%arg0: i32) -> (i32, i32) {
    %c0_i32 = arith.constant 0 : i32
    %c0_i32_0 = arith.constant 0 : i32
    return %c0_i32, %arg0 : i32, i32
  }
}

</mosaic_0001>

<llo_original>
// kernel: encoder_decoder_forward.1
$region0: #{encoder_decoder_forward.1}
  #allocation0 [shape = 'u32[]', space=smem, size = 0x4, offset = 0x4, fixed_abs, tag = 'smem constant byte address 0x4 - core index']
  #allocation1 [shape = 'u32[144,128]{1,0:T(1,128)}', space=vmem, size = 0x12000, scoped, tag = 'internal scratch']
  %s0 = inlined_call_operand.hbm [shape: f32[11,128], index: 0, kind: input, shape index: {}]
  %s1 = inlined_call_operand.hbm [shape: f32[6,11], index: 1, kind: input, shape index: {}]
  %s2 = inlined_call_operand.hbm [shape: f32[6,1], index: 2, kind: input, shape index: {}]
  %s3 = inlined_call_operand.hbm [shape: f32[2,6], index: 3, kind: input, shape index: {}]
  %s4 = inlined_call_operand.hbm [shape: f32[2,1], index: 4, kind: input, shape index: {}]
  %s5 = inlined_call_operand.hbm [shape: f32[6,2], index: 5, kind: input, shape index: {}]
  %s6 = inlined_call_operand.hbm [shape: f32[6,1], index: 6, kind: input, shape index: {}]
  %s7 = inlined_call_operand.hbm [shape: f32[11,6], index: 7, kind: input, shape index: {}]
  %s8 = inlined_call_operand.hbm [shape: f32[11,1], index: 8, kind: input, shape index: {}]
  %s9 = inlined_call_operand.hbm [shape: f32[13,128], index: 9, kind: output, shape index: {}]
  %s10 = sld [smem:[#allocation0]]
  $region82: #{encoder_decoder_forward.1} parent=0
    _
  %s12 = ssub.s32 1, %s10
  %s13 = scalar_select 0, %s12, %s10
  $region1: #{encoder_decoder_forward.1} parent=0
    #allocation2 [shape = 'u8[8192]{0}', space=vmem, size = 0x2000, scoped, tag = 'input window, operand 0, single buffered']
    #allocation3 [shape = 's32[1]{0}', space=sflag, size = 0x4, scoped, tag = 'scoped memory for encoder_decoder_forward.1']
    #allocation4 [shape = 's32[1]{0}', space=sflag, size = 0x4, scoped, tag = 'scoped memory for encoder_decoder_forward.1']
    #allocation5 [shape = 'u8[4096]{0}', space=vmem, size = 0x1000, scoped, tag = 'input window, operand 1, single buffered']
    #allocation6 [shape = 's32[1]{0}', space=sflag, size = 0x4, scoped, tag = 'scoped memory for encoder_decoder_forward.1']
    #allocation7 [shape = 'u8[4096]{0}', space=vmem, size = 0x1000, scoped, tag = 'input window, operand 2, single buffered']
    #allocation8 [shape = 'u8[1024]{0}', space=vmem, size = 0x400, scoped, tag = 'input window, operand 3, single buffered']
    #allocation9 [shape = 's32[1]{0}', space=sflag, size = 0x4, scoped, tag = 'scoped memory for encoder_decoder_forward.1']
    #allocation10 [shape = 'u8[1024]{0}', space=vmem, size = 0x400, scoped, tag = 'input window, operand 4, single buffered']
    #allocation11 [shape = 'u8[4096]{0}', space=vmem, size = 0x1000, scoped, tag = 'input window, operand 5, single buffered']
    #allocation12 [shape = 's32[1]{0}', space=sflag, size = 0x4, scoped, tag = 'scoped memory for encoder_decoder_forward.1']
    #allocation13 [shape = 'u8[4096]{0}', space=vmem, size = 0x1000, scoped, tag = 'input window, operand 6, single buffered']
    #allocation14 [shape = 'u8[8192]{0}', space=vmem, size = 0x2000, scoped, tag = 'input window, operand 7, single buffered']
    #allocation15 [shape = 's32[1]{0}', space=sflag, size = 0x4, scoped, tag = 'scoped memory for encoder_decoder_forward.1']
    #allocation16 [shape = 'u8[8192]{0}', space=vmem, size = 0x2000, scoped, tag = 'input window, operand 8, single buffered']
    #allocation17 [shape = 'u8[8192]{0}', space=vmem, size = 0x2000, scoped, tag = 'output window, operand 0, single buffered']
    %14 = vsyncpa [#allocation3], 0
    %15 = vsyncpa [#allocation6], 0
    %16 = vsyncpa [#allocation9], 0
    %17 = vsyncpa [#allocation12], 0
    %18 = vsyncpa [#allocation15], 0
    %19 = vsyncpa [#allocation4], 0
    // Predicated region
    $region2: #{encoder_decoder_forward.1} parent=1 // pred_check
      _
    $region3: #{encoder_decoder_forward.1} parent=1 // pred_check_branch
      %21 = sbr.rel (0) target = $region5
    $region4: #{encoder_decoder_forward.1} parent=1 // pred_region
      %s23 = ssub.s32 256, 256
      %24 = vsyncadd [#allocation3], %s23
      %s25 = sshll.u32 [#allocation2], 4
      %s26 = int_to_ptr.vmem [resolvable:$true] %s25
      %31 = dma.hbm_to_vmem [thread:$0]  %s0, 256, %s26, [#allocation3], 128, 128, 8
    $region5: #{encoder_decoder_forward.1} parent=1 // pred_fallthru
      _
    // Predicated region
    $region6: #{encoder_decoder_forward.1} parent=1 // pred_check
      _
    $region7: #{encoder_decoder_forward.1} parent=1 // pred_check_branch
      %33 = sbr.rel (0) target = $region9
    $region8: #{encoder_decoder_forward.1} parent=1 // pred_region
      %s35 = ssub.s32 128, 128
      %36 = vsyncadd [#allocation6], %s35
      %s38 = sshll.u32 [#allocation5], 4
      %s39 = int_to_ptr.vmem [resolvable:$true] %s38
      %41 = dma.hbm_to_vmem [thread:$0]  %s1, 128, %s39, [#allocation6]
    $region9: #{encoder_decoder_forward.1} parent=1 // pred_fallthru
      _
    // Predicated region
    $region10: #{encoder_decoder_forward.1} parent=1 // pred_check
      _
    $region11: #{encoder_decoder_forward.1} parent=1 // pred_check_branch
      %43 = sbr.rel (0) target = $region13
    $region12: #{encoder_decoder_forward.1} parent=1 // pred_region
      %s45 = ssub.s32 128, 128
      %46 = vsyncadd [#allocation6], %s45
      %s48 = sshll.u32 [#allocation7], 4
      %s49 = int_to_ptr.vmem [resolvable:$true] %s48
      %51 = dma.hbm_to_vmem [thread:$0]  %s2, 128, %s49, [#allocation6]
    $region13: #{encoder_decoder_forward.1} parent=1 // pred_fallthru
      _
    // Predicated region
    $region14: #{encoder_decoder_forward.1} parent=1 // pred_check
      _
    $region15: #{encoder_decoder_forward.1} parent=1 // pred_check_branch
      %53 = sbr.rel (0) target = $region17
    $region16: #{encoder_decoder_forward.1} parent=1 // pred_region
      %s55 = ssub.s32 32, 32
      %56 = vsyncadd [#allocation9], %s55
      %s58 = sshll.u32 [#allocation8], 4
      %s59 = int_to_ptr.vmem [resolvable:$true] %s58
      %61 = dma.hbm_to_vmem [thread:$0]  %s3, 32, %s59, [#allocation9]
    $region17: #{encoder_decoder_forward.1} parent=1 // pred_fallthru
      _
    // Predicated region
    $region18: #{encoder_decoder_forward.1} parent=1 // pred_check
      _
    $region19: #{encoder_decoder_forward.1} parent=1 // pred_check_branch
      %63 = sbr.rel (0) target = $region21
    $region20: #{encoder_decoder_forward.1} parent=1 // pred_region
      %s65 = ssub.s32 32, 32
      %66 = vsyncadd [#allocation9], %s65
      %s68 = sshll.u32 [#allocation10], 4
      %s69 = int_to_ptr.vmem [resolvable:$true] %s68
      %71 = dma.hbm_to_vmem [thread:$0]  %s4, 32, %s69, [#allocation9]
    $region21: #{encoder_decoder_forward.1} parent=1 // pred_fallthru
      _
    // Predicated region
    $region22: #{encoder_decoder_forward.1} parent=1 // pred_check
      _
    $region23: #{encoder_decoder_forward.1} parent=1 // pred_check_branch
      %73 = sbr.rel (0) target = $region25
    $region24: #{encoder_decoder_forward.1} parent=1 // pred_region
      %s75 = ssub.s32 128, 128
      %76 = vsyncadd [#allocation12], %s75
      %s78 = sshll.u32 [#allocation11], 4
      %s79 = int_to_ptr.vmem [resolvable:$true] %s78
      %81 = dma.hbm_to_vmem [thread:$0]  %s5, 128, %s79, [#allocation12]
    $region25: #{encoder_decoder_forward.1} parent=1 // pred_fallthru
      _
    // Predicated region
    $region26: #{encoder_decoder_forward.1} parent=1 // pred_check
      _
    $region27: #{encoder_decoder_forward.1} parent=1 // pred_check_branch
      %83 = sbr.rel (0) target = $region29
    $region28: #{encoder_decoder_forward.1} parent=1 // pred_region
      %s85 = ssub.s32 128, 128
      %86 = vsyncadd [#allocation12], %s85
      %s88 = sshll.u32 [#allocation13], 4
      %s89 = int_to_ptr.vmem [resolvable:$true] %s88
      %91 = dma.hbm_to_vmem [thread:$0]  %s6, 128, %s89, [#allocation12]
    $region29: #{encoder_decoder_forward.1} parent=1 // pred_fallthru
      _
    // Predicated region
    $region30: #{encoder_decoder_forward.1} parent=1 // pred_check
      _
    $region31: #{encoder_decoder_forward.1} parent=1 // pred_check_branch
      %93 = sbr.rel (0) target = $region33
    $region32: #{encoder_decoder_forward.1} parent=1 // pred_region
      %s95 = ssub.s32 256, 256
      %96 = vsyncadd [#allocation15], %s95
      %s97 = sshll.u32 [#allocation14], 4
      %s98 = int_to_ptr.vmem [resolvable:$true] %s97
      %103 = dma.hbm_to_vmem [thread:$0]  %s7, 256, %s98, [#allocation15], 128, 128, 8
    $region33: #{encoder_decoder_forward.1} parent=1 // pred_fallthru
      _
    // Predicated region
    $region34: #{encoder_decoder_forward.1} parent=1 // pred_check
      _
    $region35: #{encoder_decoder_forward.1} parent=1 // pred_check_branch
      %105 = sbr.rel (0) target = $region37
    $region36: #{encoder_decoder_forward.1} parent=1 // pred_region
      %s107 = ssub.s32 256, 256
      %108 = vsyncadd [#allocation15], %s107
      %s109 = sshll.u32 [#allocation16], 4
      %s110 = int_to_ptr.vmem [resolvable:$true] %s109
      %115 = dma.hbm_to_vmem [thread:$0]  %s8, 256, %s110, [#allocation15], 128, 128, 8
    $region37: #{encoder_decoder_forward.1} parent=1 // pred_fallthru
      _
    // Predicated region
    $region38: #{encoder_decoder_forward.1} parent=1 // pred_check
      _
    $region39: #{encoder_decoder_forward.1} parent=1 // pred_check_branch
      %117 = sbr.rel (0) target = $region41
    $region40: #{encoder_decoder_forward.1} parent=1 // pred_region
      %118 = dma.done [#allocation3], 256
    $region41: #{encoder_decoder_forward.1} parent=1 // pred_fallthru
      _
    // Predicated region
    $region42: #{encoder_decoder_forward.1} parent=1 // pred_check
      _
    $region43: #{encoder_decoder_forward.1} parent=1 // pred_check_branch
      %120 = sbr.rel (0) target = $region45
    $region44: #{encoder_decoder_forward.1} parent=1 // pred_region
      %121 = dma.done [#allocation6], 128
    $region45: #{encoder_decoder_forward.1} parent=1 // pred_fallthru
      _
    // Predicated region
    $region46: #{encoder_decoder_forward.1} parent=1 // pred_check
      _
    $region47: #{encoder_decoder_forward.1} parent=1 // pred_check_branch
      %123 = sbr.rel (0) target = $region49
    $region48: #{encoder_decoder_forward.1} parent=1 // pred_region
      %124 = dma.done [#allocation6], 128
    $region49: #{encoder_decoder_forward.1} parent=1 // pred_fallthru
      _
    // Predicated region
    $region50: #{encoder_decoder_forward.1} parent=1 // pred_check
      _
    $region51: #{encoder_decoder_forward.1} parent=1 // pred_check_branch
      %126 = sbr.rel (0) target = $region53
    $region52: #{encoder_decoder_forward.1} parent=1 // pred_region
      %127 = dma.done [#allocation9], 32
    $region53: #{encoder_decoder_forward.1} parent=1 // pred_fallthru
      _
    // Predicated region
    $region54: #{encoder_decoder_forward.1} parent=1 // pred_check
      _
    $region55: #{encoder_decoder_forward.1} parent=1 // pred_check_branch
      %129 = sbr.rel (0) target = $region57
    $region56: #{encoder_decoder_forward.1} parent=1 // pred_region
      %130 = dma.done [#allocation9], 32
    $region57: #{encoder_decoder_forward.1} parent=1 // pred_fallthru
      _
    // Predicated region
    $region58: #{encoder_decoder_forward.1} parent=1 // pred_check
      _
    $region59: #{encoder_decoder_forward.1} parent=1 // pred_check_branch
      %132 = sbr.rel (0) target = $region61
    $region60: #{encoder_decoder_forward.1} parent=1 // pred_region
      %133 = dma.done [#allocation12], 128
    $region61: #{encoder_decoder_forward.1} parent=1 // pred_fallthru
      _
    // Predicated region
    $region62: #{encoder_decoder_forward.1} parent=1 // pred_check
      _
    $region63: #{encoder_decoder_forward.1} parent=1 // pred_check_branch
      %135 = sbr.rel (0) target = $region65
    $region64: #{encoder_decoder_forward.1} parent=1 // pred_region
      %136 = dma.done [#allocation12], 128
    $region65: #{encoder_decoder_forward.1} parent=1 // pred_fallthru
      _
    // Predicated region
    $region66: #{encoder_decoder_forward.1} parent=1 // pred_check
      _
    $region67: #{encoder_decoder_forward.1} parent=1 // pred_check_branch
      %138 = sbr.rel (0) target = $region69
    $region68: #{encoder_decoder_forward.1} parent=1 // pred_region
      %139 = dma.done [#allocation15], 256
    $region69: #{encoder_decoder_forward.1} parent=1 // pred_fallthru
      _
    // Predicated region
    $region70: #{encoder_decoder_forward.1} parent=1 // pred_check
      _
    $region71: #{encoder_decoder_forward.1} parent=1 // pred_check_branch
      %141 = sbr.rel (0) target = $region73
    $region72: #{encoder_decoder_forward.1} parent=1 // pred_region
      %142 = dma.done [#allocation15], 256
    $region73: #{encoder_decoder_forward.1} parent=1 // pred_fallthru
      _
    %v143 = vld [vmem:[#allocation2] sm:$0xff]
    %v144 = vld [vmem:[#allocation2 + $0x8] sm:$0x7]
    %v145 = vld [vmem:[#allocation5] sm:$0x3f]
    %v146 = vld [vmem:[#allocation7] sm:$0x3f]
    %148 = vset.pattern.permute.xlu0 0
    %149 = vperm.xlu0 %148, %v146
    %v150 = vpop.permute.xlu0 %149
    %vm152 = vcmask 89088
    %v154 = vsel %vm152, %v145, 0
    %vm156 = vcmask 1042432
    %v158 = vsel %vm156, %v144, 0
    %160 = vmatprep.subr.mxu0 0.0
    %161 = vmatpush1.msra.mxu0 %v143
    %162 = vmatprep.subr.mxu0 0.0
    %163 = vmatpush1.msra.mxu0 %v158
    %164 = vmatprep.subr.mxu0 0.0
    %165 = vmatpush1.msra.mxu0 0.0
    %166 = vmatprep.subr.mxu0 0.0
    %167 = vmatpush1.msra.mxu0 0.0
    %168 = vmatprep.subr.mxu0 0.0
    %169 = vmatpush1.msra.mxu0 0.0
    %170 = vmatprep.subr.mxu0 0.0
    %171 = vmatpush1.msra.mxu0 0.0
    %172 = vmatprep.subr.mxu0 0.0
    %173 = vmatpush1.msra.mxu0 0.0
    %174 = vmatprep.subr.mxu0 0.0
    %175 = vmatpush1.msra.mxu0 0.0
    %176 = vmatprep.subr.mxu0 0.0
    %177 = vmatpush1.msra.mxu0 0.0
    %178 = vmatprep.subr.mxu0 0.0
    %179 = vmatpush1.msra.mxu0 0.0
    %180 = vmatprep.subr.mxu0 0.0
    %181 = vmatpush1.msra.mxu0 0.0
    %182 = vmatprep.subr.mxu0 0.0
    %183 = vmatpush1.msra.mxu0 0.0
    %184 = vmatprep.subr.mxu0 0.0
    %185 = vmatpush1.msra.mxu0 0.0
    %186 = vmatprep.subr.mxu0 0.0
    %187 = vmatpush1.msra.mxu0 0.0
    %188 = vmatprep.subr.mxu0 0.0
    %189 = vmatpush1.msra.mxu0 0.0
    %190 = vmatprep.subr.mxu0 0.0
    %191 = vmatpush1.msra.mxu0 0.0
    %192 = vmatprep.subr.mxu0 0.0
    %193 = vmatpush1.msra.mxu0 0.0
    %194 = vmatprep.subr.mxu0 0.0
    %195 = vmatpush1.msra.mxu0 0.0
    %196 = vmatprep.subr.mxu0 0.0
    %197 = vmatpush1.msra.mxu0 0.0
    %198 = vmatprep.subr.mxu0 0.0
    %199 = vmatpush1.msra.mxu0 0.0
    %200 = vmatprep.subr.mxu0 0.0
    %201 = vmatpush1.msra.mxu0 0.0
    %202 = vmatprep.subr.mxu0 0.0
    %203 = vmatpush1.msra.mxu0 0.0
    %204 = vmatprep.subr.mxu0 0.0
    %205 = vmatpush1.msra.mxu0 0.0
    %206 = vmatprep.subr.mxu0 0.0
    %207 = vmatpush1.msra.mxu0 0.0
    %208 = vmatprep.subr.mxu0 0.0
    %209 = vmatpush1.msra.mxu0 0.0
    %210 = vmatprep.subr.mxu0 0.0
    %211 = vmatpush1.msra.mxu0 0.0
    %212 = vmatprep.subr.mxu0 0.0
    %213 = vmatpush1.msra.mxu0 0.0
    %214 = vmatprep.subr.mxu0 0.0
    %215 = vmatpush1.msra.mxu0 0.0
    %216 = vmatprep.subr.mxu0 0.0
    %217 = vmatpush1.msra.mxu0 0.0
    %218 = vmatprep.subr.mxu0 0.0
    %219 = vmatpush1.msra.mxu0 0.0
    %220 = vmatprep.subr.mxu0 0.0
    %221 = vmatpush1.msra.mxu0 0.0
    %222 = vmatprep.subr.mxu0 0.0
    %223 = vmatpush1.msra.mxu0 0.0
    %224 = vmatprep.mubr.f32.mxu0 0.0
    %225 = vmatmul.mubr.f32.gmra.mrb[0].mxu0 %v154
    %v226 = vpop.f32.mrb[0].mxu0
    %v227 = vadd.f32 %v150, %v226
    %v228 = vpop.f32.mrb[0].mxu0
    %229 = vdwg.mxu0
    %v230 = vtanh.pop %v227
    %v231 = vld [vmem:[#allocation8] sm:$0x3]
    %v232 = vld [vmem:[#allocation10] sm:$0x3]
    %234 = vset.pattern.permute.xlu0 0
    %235 = vperm.xlu0 %234, %v232
    %v236 = vpop.permute.xlu0 %235
    %vm238 = vcmask 48128
    %v240 = vsel %vm238, %v231, 0
    %vm242 = vcmask 1045504
    %v244 = vsel %vm242, %v230, 0
    %246 = vmatprep.subr.mxu0 0.0
    %247 = vmatpush1.msra.mxu0 %v244
    %248 = vmatprep.subr.mxu0 0.0
    %249 = vmatpush1.msra.mxu0 0.0
    %250 = vmatprep.subr.mxu0 0.0
    %251 = vmatpush1.msra.mxu0 0.0
    %252 = vmatprep.subr.mxu0 0.0
    %253 = vmatpush1.msra.mxu0 0.0
    %254 = vmatprep.subr.mxu0 0.0
    %255 = vmatpush1.msra.mxu0 0.0
    %256 = vmatprep.subr.mxu0 0.0
    %257 = vmatpush1.msra.mxu0 0.0
    %258 = vmatprep.subr.mxu0 0.0
    %259 = vmatpush1.msra.mxu0 0.0
    %260 = vmatprep.subr.mxu0 0.0
    %261 = vmatpush1.msra.mxu0 0.0
    %262 = vmatprep.subr.mxu0 0.0
    %263 = vmatpush1.msra.mxu0 0.0
    %264 = vmatprep.subr.mxu0 0.0
    %265 = vmatpush1.msra.mxu0 0.0
    %266 = vmatprep.subr.mxu0 0.0
    %267 = vmatpush1.msra.mxu0 0.0
    %268 = vmatprep.subr.mxu0 0.0
    %269 = vmatpush1.msra.mxu0 0.0
    %270 = vmatprep.subr.mxu0 0.0
    %271 = vmatpush1.msra.mxu0 0.0
    %272 = vmatprep.subr.mxu0 0.0
    %273 = vmatpush1.msra.mxu0 0.0
    %274 = vmatprep.subr.mxu0 0.0
    %275 = vmatpush1.msra.mxu0 0.0
    %276 = vmatprep.subr.mxu0 0.0
    %277 = vmatpush1.msra.mxu0 0.0
    %278 = vmatprep.subr.mxu0 0.0
    %279 = vmatpush1.msra.mxu0 0.0
    %280 = vmatprep.subr.mxu0 0.0
    %281 = vmatpush1.msra.mxu0 0.0
    %282 = vmatprep.subr.mxu0 0.0
    %283 = vmatpush1.msra.mxu0 0.0
    %284 = vmatprep.subr.mxu0 0.0
    %285 = vmatpush1.msra.mxu0 0.0
    %286 = vmatprep.subr.mxu0 0.0
    %287 = vmatpush1.msra.mxu0 0.0
    %288 = vmatprep.subr.mxu0 0.0
    %289 = vmatpush1.msra.mxu0 0.0
    %290 = vmatprep.subr.mxu0 0.0
    %291 = vmatpush1.msra.mxu0 0.0
    %292 = vmatprep.subr.mxu0 0.0
    %293 = vmatpush1.msra.mxu0 0.0
    %294 = vmatprep.subr.mxu0 0.0
    %295 = vmatpush1.msra.mxu0 0.0
    %296 = vmatprep.subr.mxu0 0.0
    %297 = vmatpush1.msra.mxu0 0.0
    %298 = vmatprep.subr.mxu0 0.0
    %299 = vmatpush1.msra.mxu0 0.0
    %300 = vmatprep.subr.mxu0 0.0
    %301 = vmatpush1.msra.mxu0 0.0
    %302 = vmatprep.subr.mxu0 0.0
    %303 = vmatpush1.msra.mxu0 0.0
    %304 = vmatprep.subr.mxu0 0.0
    %305 = vmatpush1.msra.mxu0 0.0
    %306 = vmatprep.subr.mxu0 0.0
    %307 = vmatpush1.msra.mxu0 0.0
    %308 = vmatprep.subr.mxu0 0.0
    %309 = vmatpush1.msra.mxu0 0.0
    %310 = vmatprep.mubr.f32.mxu0 0.0
    %311 = vmatmul.mubr.f32.gmra.mrb[0].mxu0 %v240
    %v312 = vpop.f32.mrb[0].mxu0
    %v313 = vadd.f32 %v236, %v312
    %v314 = vpop.f32.mrb[0].mxu0
    %315 = vdwg.mxu0
    %vm316 = vcmp.ge.f32.partialorder %v313, 0.0
    %v317 = vmul.f32 %v313, 0.01
    %v318 = vsel %vm316, %v313, %v317
    %v319 = vld [vmem:[#allocation11] sm:$0x3f]
    %v320 = vld [vmem:[#allocation13] sm:$0x3f]
    %322 = vset.pattern.permute.xlu0 0
    %323 = vperm.xlu0 %322, %v320
    %v324 = vpop.permute.xlu0 %323
    %vm326 = vcmask 15360
    %v328 = vsel %vm326, %v319, 0
    %vm330 = vcmask 1041408
    %v332 = vsel %vm330, %v318, 0
    %334 = vmatprep.subr.mxu0 0.0
    %335 = vmatpush1.msra.mxu0 %v332
    %336 = vmatprep.subr.mxu0 0.0
    %337 = vmatpush1.msra.mxu0 0.0
    %338 = vmatprep.subr.mxu0 0.0
    %339 = vmatpush1.msra.mxu0 0.0
    %340 = vmatprep.subr.mxu0 0.0
    %341 = vmatpush1.msra.mxu0 0.0
    %342 = vmatprep.subr.mxu0 0.0
    %343 = vmatpush1.msra.mxu0 0.0
    %344 = vmatprep.subr.mxu0 0.0
    %345 = vmatpush1.msra.mxu0 0.0
    %346 = vmatprep.subr.mxu0 0.0
    %347 = vmatpush1.msra.mxu0 0.0
    %348 = vmatprep.subr.mxu0 0.0
    %349 = vmatpush1.msra.mxu0 0.0
    %350 = vmatprep.subr.mxu0 0.0
    %351 = vmatpush1.msra.mxu0 0.0
    %352 = vmatprep.subr.mxu0 0.0
    %353 = vmatpush1.msra.mxu0 0.0
    %354 = vmatprep.subr.mxu0 0.0
    %355 = vmatpush1.msra.mxu0 0.0
    %356 = vmatprep.subr.mxu0 0.0
    %357 = vmatpush1.msra.mxu0 0.0
    %358 = vmatprep.subr.mxu0 0.0
    %359 = vmatpush1.msra.mxu0 0.0
    %360 = vmatprep.subr.mxu0 0.0
    %361 = vmatpush1.msra.mxu0 0.0
    %362 = vmatprep.subr.mxu0 0.0
    %363 = vmatpush1.msra.mxu0 0.0
    %364 = vmatprep.subr.mxu0 0.0
    %365 = vmatpush1.msra.mxu0 0.0
    %366 = vmatprep.subr.mxu0 0.0
    %367 = vmatpush1.msra.mxu0 0.0
    %368 = vmatprep.subr.mxu0 0.0
    %369 = vmatpush1.msra.mxu0 0.0
    %370 = vmatprep.subr.mxu0 0.0
    %371 = vmatpush1.msra.mxu0 0.0
    %372 = vmatprep.subr.mxu0 0.0
    %373 = vmatpush1.msra.mxu0 0.0
    %374 = vmatprep.subr.mxu0 0.0
    %375 = vmatpush1.msra.mxu0 0.0
    %376 = vmatprep.subr.mxu0 0.0
    %377 = vmatpush1.msra.mxu0 0.0
    %378 = vmatprep.subr.mxu0 0.0
    %379 = vmatpush1.msra.mxu0 0.0
    %380 = vmatprep.subr.mxu0 0.0
    %381 = vmatpush1.msra.mxu0 0.0
    %382 = vmatprep.subr.mxu0 0.0
    %383 = vmatpush1.msra.mxu0 0.0
    %384 = vmatprep.subr.mxu0 0.0
    %385 = vmatpush1.msra.mxu0 0.0
    %386 = vmatprep.subr.mxu0 0.0
    %387 = vmatpush1.msra.mxu0 0.0
    %388 = vmatprep.subr.mxu0 0.0
    %389 = vmatpush1.msra.mxu0 0.0
    %390 = vmatprep.subr.mxu0 0.0
    %391 = vmatpush1.msra.mxu0 0.0
    %392 = vmatprep.subr.mxu0 0.0
    %393 = vmatpush1.msra.mxu0 0.0
    %394 = vmatprep.subr.mxu0 0.0
    %395 = vmatpush1.msra.mxu0 0.0
    %396 = vmatprep.subr.mxu0 0.0
    %397 = vmatpush1.msra.mxu0 0.0
    %398 = vmatprep.mubr.f32.mxu0 0.0
    %399 = vmatmul.mubr.f32.gmra.mrb[0].mxu0 %v328
    %v400 = vpop.f32.mrb[0].mxu0
    %v401 = vadd.f32 %v324, %v400
    %v402 = vpop.f32.mrb[0].mxu0
    %403 = vdwg.mxu0
    %v404 = vtanh.pop %v401
    %v405 = vld [vmem:[#allocation14] sm:$0xff]
    %v406 = vld [vmem:[#allocation14 + $0x8] sm:$0x7]
    %v407 = vld [vmem:[#allocation16] sm:$0xff]
    %v408 = vld [vmem:[#allocation16 + $0x8] sm:$0x7]
    %410 = vset.pattern.permute.xlu0 0
    %411 = vperm.xlu0 %410, %v407
    %v412 = vpop.permute.xlu0 %411
    %415 = vset.pattern.permute.xlu0 0
    %416 = vperm.xlu0 %415, %v408
    %v417 = vpop.permute.xlu0 %416
    %v420 = vsel %vm238, %v405, 0
    %v423 = vsel %vm238, %v406, 0
    %v426 = vsel %vm242, %v404, 0
    %428 = vmatprep.subr.mxu0 0.0
    %429 = vmatpush1.msra.mxu0 %v426
    %430 = vmatprep.subr.mxu0 0.0
    %431 = vmatpush1.msra.mxu0 0.0
    %432 = vmatprep.subr.mxu0 0.0
    %433 = vmatpush1.msra.mxu0 0.0
    %434 = vmatprep.subr.mxu0 0.0
    %435 = vmatpush1.msra.mxu0 0.0
    %436 = vmatprep.subr.mxu0 0.0
    %437 = vmatpush1.msra.mxu0 0.0
    %438 = vmatprep.subr.mxu0 0.0
    %439 = vmatpush1.msra.mxu0 0.0
    %440 = vmatprep.subr.mxu0 0.0
    %441 = vmatpush1.msra.mxu0 0.0
    %442 = vmatprep.subr.mxu0 0.0
    %443 = vmatpush1.msra.mxu0 0.0
    %444 = vmatprep.subr.mxu0 0.0
    %445 = vmatpush1.msra.mxu0 0.0
    %446 = vmatprep.subr.mxu0 0.0
    %447 = vmatpush1.msra.mxu0 0.0
    %448 = vmatprep.subr.mxu0 0.0
    %449 = vmatpush1.msra.mxu0 0.0
    %450 = vmatprep.subr.mxu0 0.0
    %451 = vmatpush1.msra.mxu0 0.0
    %452 = vmatprep.subr.mxu0 0.0
    %453 = vmatpush1.msra.mxu0 0.0
    %454 = vmatprep.subr.mxu0 0.0
    %455 = vmatpush1.msra.mxu0 0.0
    %456 = vmatprep.subr.mxu0 0.0
    %457 = vmatpush1.msra.mxu0 0.0
    %458 = vmatprep.subr.mxu0 0.0
    %459 = vmatpush1.msra.mxu0 0.0
    %460 = vmatprep.subr.mxu0 0.0
    %461 = vmatpush1.msra.mxu0 0.0
    %462 = vmatprep.subr.mxu0 0.0
    %463 = vmatpush1.msra.mxu0 0.0
    %464 = vmatprep.subr.mxu0 0.0
    %465 = vmatpush1.msra.mxu0 0.0
    %466 = vmatprep.subr.mxu0 0.0
    %467 = vmatpush1.msra.mxu0 0.0
    %468 = vmatprep.subr.mxu0 0.0
    %469 = vmatpush1.msra.mxu0 0.0
    %470 = vmatprep.subr.mxu0 0.0
    %471 = vmatpush1.msra.mxu0 0.0
    %472 = vmatprep.subr.mxu0 0.0
    %473 = vmatpush1.msra.mxu0 0.0
    %474 = vmatprep.subr.mxu0 0.0
    %475 = vmatpush1.msra.mxu0 0.0
    %476 = vmatprep.subr.mxu0 0.0
    %477 = vmatpush1.msra.mxu0 0.0
    %478 = vmatprep.subr.mxu0 0.0
    %479 = vmatpush1.msra.mxu0 0.0
    %480 = vmatprep.subr.mxu0 0.0
    %481 = vmatpush1.msra.mxu0 0.0
    %482 = vmatprep.subr.mxu0 0.0
    %483 = vmatpush1.msra.mxu0 0.0
    %484 = vmatprep.subr.mxu0 0.0
    %485 = vmatpush1.msra.mxu0 0.0
    %486 = vmatprep.subr.mxu0 0.0
    %487 = vmatpush1.msra.mxu0 0.0
    %488 = vmatprep.subr.mxu0 0.0
    %489 = vmatpush1.msra.mxu0 0.0
    %490 = vmatprep.subr.mxu0 0.0
    %491 = vmatpush1.msra.mxu0 0.0
    %492 = vmatprep.mubr.f32.mxu0 0.0
    %493 = vmatmul.mubr.f32.gmra.mrb[0].mxu0 %v420
    %v494 = vpop.f32.mrb[0].mxu0
    %v495 = vadd.f32 %v412, %v494
    %v496 = vpop.f32.mrb[0].mxu0
    %497 = vmatprep.mubr.f32.mxu0 0.0
    %498 = vmatmul.mubr.f32.gmra.mrb[0].mxu0 %v423
    %v499 = vpop.f32.mrb[0].mxu0
    %v500 = vadd.f32 %v417, %v499
    %v501 = vpop.f32.mrb[0].mxu0
    %502 = vdwg.mxu0
    %vm503 = vcmp.ge.f32.partialorder %v495, 0.0
    %vm504 = vcmp.ge.f32.partialorder %v500, 0.0
    %v505 = vmul.f32 %v495, 0.01
    %v506 = vmul.f32 %v500, 0.01
    %v507 = vsel %vm503, %v495, %v505
    %v508 = vsel %vm504, %v500, %v506
    %509 = vst [vmem:[#allocation17] sm:$0x3] %v318
    %510 = vst [vmem:[#allocation17 + $0x2] sm:$0xff] %v507
    %511 = vst [vmem:[#allocation17 + $0xa] sm:$0x7] %v508
    // Predicated region
    $region74: #{encoder_decoder_forward.1} parent=1 // pred_check
      _
    $region75: #{encoder_decoder_forward.1} parent=1 // pred_check_branch
      %513 = sbr.rel (0) target = $region77
    $region76: #{encoder_decoder_forward.1} parent=1 // pred_region
      %s515 = ssub.s32 256, 256
      %516 = vsyncadd [#allocation4], %s515
      %s517 = sshll.u32 [#allocation17], 4
      %s518 = int_to_ptr.vmem [resolvable:$true] %s517
      %523 = dma.vmem_to_hbm [thread:$0]  %s518, 256, %s9, [#allocation4], 128, 128, 8
    $region77: #{encoder_decoder_forward.1} parent=1 // pred_fallthru
      _
    // Predicated region
    $region78: #{encoder_decoder_forward.1} parent=1 // pred_check
      _
    $region79: #{encoder_decoder_forward.1} parent=1 // pred_check_branch
      %525 = sbr.rel (0) target = $region81
    $region80: #{encoder_decoder_forward.1} parent=1 // pred_region
      %526 = dma.done [#allocation4], 256
    $region81: #{encoder_decoder_forward.1} parent=1 // pred_fallthru
      _
    %527 = vsyncpa [#allocation3], 1
    %528 = vsyncpa [#allocation6], 1
    %529 = vsyncpa [#allocation9], 1
    %530 = vsyncpa [#allocation12], 1
    %531 = vsyncpa [#allocation15], 1
    %532 = vsyncpa [#allocation4], 1

</llo_original>
